<compile_context>
chip_gen: v7x
topology: tpu7x:2x2x1
jax: 0.10.0
libtpu: 0.0.40
codegen_flags: <defaults>
</compile_context>

<pallas_src>
import math
import numpy as np
import jax
import jax.numpy as jnp
from jax.experimental import pallas as pl
from jax.experimental.pallas import tpu as pltpu  # noqa: F401  (TPU backend assumed)


def _gaussian_kernels(kernel_size, sigma):
    """Replicates the PyTorch __init__: three normalized (K, K) gaussian kernels."""
    if isinstance(kernel_size, (int, float)):
        kernel_size = [int(kernel_size), int(kernel_size)]
    cascade_coefficients = [0.5, 1.0, 2.0]
    sigmas = [[c * sigma, c * sigma] for c in cascade_coefficients]
    grids = np.meshgrid(
        *[np.arange(s, dtype=np.float32) for s in kernel_size], indexing="ij"
    )
    kernels = []
    for sig in sigmas:
        kern = np.ones_like(grids[0])
        for size_1d, std_1d, grid in zip(kernel_size, sig, grids):
            mean = (size_1d - 1) / 2
            kern = kern * (
                1.0 / (std_1d * math.sqrt(2 * math.pi))
                * np.exp(-(((grid - mean) / std_1d) ** 2) / 2)
            )
        kern = kern / kern.sum()
        kernels.append(kern.astype(np.float32))
    return kernels, int(kernel_size[0] // 2)


def _reflect_index(idx, n):
    """PyTorch/jnp 'reflect' (edge pixel not duplicated); valid for |overhang| < n."""
    idx = np.where(idx < 0, -idx, idx)
    idx = np.where(idx >= n, 2 * (n - 1) - idx, idx)
    return idx


def _conv_matrix_reflect(w_avg, H, W, pad):
    """Dense (H*W, H*W) matrix M with reflect padding folded in, such that
    out_flat = x_flat @ M  reproduces F.pad(reflect) + VALID cross-correlation."""
    K = w_avg.shape[0]
    M = np.zeros((H * W, H * W), dtype=np.float32)
    out_cols = (np.arange(H)[:, None] * W + np.arange(W)[None, :]).ravel()
    ys, xs = np.arange(H), np.arange(W)
    for dy in range(K):
        sy = _reflect_index(ys + dy - pad, H)          # (H,) source rows
        for dx in range(K):
            sx = _reflect_index(xs + dx - pad, W)      # (W,) source cols
            rows = (sy[:, None] * W + sx[None, :]).ravel()
            np.add.at(M, (rows, out_cols), w_avg[dy, dx])
    return M


def make_cascade_gaussian_smoothing(kernel_size, sigma, H, W):
    (w1, w2, w3), pad = _gaussian_kernels(kernel_size, sigma)
    K = w1.shape[0]
    assert K % 2 == 1, "kernel_size must be odd"
    assert pad < H and pad < W, "reflect padding requires pad < H and pad < W"
    HW = H * W

    # Exact by linearity: conv(x,w1)+conv(x,w2)+conv(x,w3) == 3*conv(x, (w1+w2+w3)/3),
    # and the /3 of the module is folded into w_avg.
    w_avg = (w1 + w2 + w3) / 3.0
    # bf16 weights: native MXU operand dtype on v5e/v6e/v7x, halves RHS DMA/VMEM.
    conv_mat = jnp.asarray(_conv_matrix_reflect(w_avg, H, W, pad), dtype=jnp.bfloat16)

    def kernel(x_ref, m_ref, o_ref):
        # x_ref: (BCp, HW) bf16, m_ref: (HW, HW) bf16, o_ref: (BCp, HW) f32 — all VMEM.
        o_ref[...] = jnp.dot(
            x_ref[...], m_ref[...], preferred_element_type=jnp.float32
        ).astype(o_ref.dtype)

    def forward(x):
        B, C, h, w = x.shape
        assert (h, w) == (H, W)
        BC = B * C
        # Pad the sublane dim to a multiple of 8 -> unmasked stores; extra MXU rows
        # are essentially free. (For DeepDream-style use, batch several gradient
        # planes per call so this dim approaches 128-256.)
        BCp = ((BC + 7) // 8) * 8
        x_flat = x.reshape(BC, HW).astype(jnp.bfloat16)
        if BCp != BC:
            x_flat = jnp.pad(x_flat, ((0, BCp - BC), (0, 0)))

        cost = pl.CostEstimate(
            flops=2 * BCp * HW * HW,
            transcendentals=0,
            bytes_accessed=BCp * HW * 2 + HW * HW * 2 + BCp * HW * 4,
        )
        out_flat = pl.pallas_call(
            kernel,
            out_shape=jax.ShapeDtypeStruct((BCp, HW), x.dtype),
            cost_estimate=cost,
        )(x_flat, conv_mat)
        return out_flat[:BC].reshape(B, C, H, W)

    return forward, (w1, w2, w3), pad


def _reference(x, weights, pad):
    """Pure-JAX reference: reflect pad + three depthwise convs, averaged (f32)."""
    C = x.shape[1]
    x_pad = jnp.pad(x, ((0, 0), (0, 0), (pad, pad), (pad, pad)), mode="reflect")
    outs = []
    for w in weights:
        wj = jnp.asarray(w)
        w_full = jnp.broadcast_to(wj[None, None], (C, 1, wj.shape[0], wj.shape[1]))
        outs.append(
            jax.lax.conv_general_dilated(
                x_pad,
                w_full,
                window_strides=(1, 1),
                padding="VALID",
                dimension_numbers=("NCHW", "OIHW", "NCHW"),
                feature_group_count=C,
                precision=jax.lax.Precision.HIGHEST,
            )
        )
    return (outs[0] + outs[1] + outs[2]) / 3.0


if __name__ == "__main__":
    # The PyTorch module repeats its kernels 3x along the output-channel axis,
    # so the forward pass requires exactly 3 input channels.
    B, C, H, W = 2, 3, 16, 16
    kernel_size = 5
    sigma = 3.0

    key = jax.random.PRNGKey(0)
    x = jax.random.normal(key, (B, C, H, W), dtype=jnp.float32)

    forward, weights, pad = make_cascade_gaussian_smoothing(kernel_size, sigma, H, W)

    out = jax.block_until_ready(forward(x))
    ref = jax.block_until_ready(_reference(x, weights, pad))

    assert out.shape == (B, C, H, W)
    # bf16 operands vs f32-HIGHEST reference: worst-case abs error ~1.5e-2 here.
    assert jnp.allclose(out, ref, rtol=2e-2, atol=3e-2), "mismatch vs reference conv"

    print("KERNEL_OK")
</pallas_src>

<mosaic_0001>
module attributes {stable_mosaic.version = 11 : i64} {
  func.func @kernel(%arg0: memref<8x256xbf16, #tpu.memory_space<vmem>>, %arg1: memref<256x256xbf16, #tpu.memory_space<vmem>>, %arg2: memref<8x256xf32, #tpu.memory_space<vmem>>) attributes {dimension_semantics = [], scalar_prefetch = 0 : i64, scratch_operands = 0 : i64, tpu.core_type = #tpu.core_type<tc>} {
    %c0 = arith.constant 0 : index
    %c0_0 = arith.constant 0 : index
    %0 = vector.load %arg0[%c0, %c0_0] : memref<8x256xbf16, #tpu.memory_space<vmem>>, vector<8x256xbf16>
    %c0_1 = arith.constant 0 : index
    %c0_2 = arith.constant 0 : index
    %1 = vector.load %arg1[%c0_1, %c0_2] : memref<256x256xbf16, #tpu.memory_space<vmem>>, vector<256x256xbf16>
    %cst = arith.constant dense<0.000000e+00> : vector<8x256xf32>
    %2 = tpu.matmul %0, %1, %cst {dimension_numbers = #tpu.dot_dimension_numbers<[1], [0], [0], [1], [0, 0, 1, 1], [], []>} : vector<8x256xbf16>, vector<256x256xbf16>, vector<8x256xf32> -> vector<8x256xf32>
    %c0_3 = arith.constant 0 : index
    %c0_4 = arith.constant 0 : index
    %3 = vector.load %arg2[%c0_3, %c0_4] : memref<8x256xf32, #tpu.memory_space<vmem>>, vector<8x256xf32>
    tpu.vector_store %arg2[%c0_3, %c0_4], %2 {strides = array<i32>} : memref<8x256xf32, #tpu.memory_space<vmem>>, vector<8x256xf32>,
    return
  }
}

</mosaic_0001>

<llo_original>
// kernel: tpu_custom_call.1
$region0: #{tpu_custom_call.1}
  #allocation0 [shape = 'u32[]', space=smem, size = 0x4, offset = 0x4, fixed_abs, tag = 'smem constant byte address 0x4 - core index']
  #allocation1 [shape = 'u32[144,128]{1,0:T(1,128)}', space=vmem, size = 0x12000, scoped, tag = 'internal scratch']
  %s0 = inlined_call_operand.hbm [shape: bf16[8,256], index: 0, kind: input, shape index: {}]
  %s1 = inlined_call_operand.hbm [shape: bf16[256,256], index: 1, kind: input, shape index: {}]
  %s2 = inlined_call_operand.hbm [shape: f32[8,256], index: 2, kind: output, shape index: {}]
  %s3 = sld [smem:[#allocation0]]
  $region26: #{tpu_custom_call.1} parent=0
    _
  %s5 = ssub.s32 1, %s3
  %s6 = scalar_select 0, %s5, %s3
  $region1: #{tpu_custom_call.1} parent=0
    #allocation2 [shape = 'u8[4096]{0}', space=vmem, size = 0x1000, scoped, tag = 'input window, operand 0, single buffered']
    #allocation3 [shape = 's32[1]{0}', space=sflag, size = 0x4, scoped, tag = 'scoped memory for tpu_custom_call.1']
    #allocation4 [shape = 's32[1]{0}', space=sflag, size = 0x4, scoped, tag = 'scoped memory for tpu_custom_call.1']
    #allocation5 [shape = 'u8[131072]{0}', space=vmem, size = 0x20000, scoped, tag = 'input window, operand 1, single buffered']
    #allocation6 [shape = 's32[1]{0}', space=sflag, size = 0x4, scoped, tag = 'scoped memory for tpu_custom_call.1']
    #allocation7 [shape = 'u8[8192]{0}', space=vmem, size = 0x2000, scoped, tag = 'output window, operand 0, single buffered']
    %7 = vsyncpa [#allocation3], 0
    %8 = vsyncpa [#allocation6], 0
    %9 = vsyncpa [#allocation4], 0
    // Predicated region
    $region2: #{tpu_custom_call.1} parent=1 // pred_check
      _
    $region3: #{tpu_custom_call.1} parent=1 // pred_check_branch
      %11 = sbr.rel (0) target = $region5
    $region4: #{tpu_custom_call.1} parent=1 // pred_region
      %s13 = ssub.s32 128, 128
      %14 = vsyncadd [#allocation3], %s13
      %s16 = sshll.u32 [#allocation2], 4
      %s17 = int_to_ptr.vmem [resolvable:$true] %s16
      %19 = dma.hbm_to_vmem [thread:$0]  %s0, 128, %s17, [#allocation3]
    $region5: #{tpu_custom_call.1} parent=1 // pred_fallthru
      _
    // Predicated region
    $region6: #{tpu_custom_call.1} parent=1 // pred_check
      _
    $region7: #{tpu_custom_call.1} parent=1 // pred_check_branch
      %21 = sbr.rel (0) target = $region9
    $region8: #{tpu_custom_call.1} parent=1 // pred_region
      %s23 = ssub.s32 4096, 4096
      %24 = vsyncadd [#allocation6], %s23
      %s25 = sshll.u32 [#allocation5], 4
      %s26 = int_to_ptr.vmem [resolvable:$true] %s25
      %31 = dma.hbm_to_vmem [thread:$0]  %s1, 4096, %s26, [#allocation6], 128, 128, 8
    $region9: #{tpu_custom_call.1} parent=1 // pred_fallthru
      _
    // Predicated region
    $region10: #{tpu_custom_call.1} parent=1 // pred_check
      _
    $region11: #{tpu_custom_call.1} parent=1 // pred_check_branch
      %33 = sbr.rel (0) target = $region13
    $region12: #{tpu_custom_call.1} parent=1 // pred_region
      %34 = dma.done [#allocation3], 128
    $region13: #{tpu_custom_call.1} parent=1 // pred_fallthru
      _
    // Predicated region
    $region14: #{tpu_custom_call.1} parent=1 // pred_check
      _
    $region15: #{tpu_custom_call.1} parent=1 // pred_check_branch
      %36 = sbr.rel (0) target = $region17
    $region16: #{tpu_custom_call.1} parent=1 // pred_region
      %37 = dma.done [#allocation6], 4096
    $region17: #{tpu_custom_call.1} parent=1 // pred_fallthru
      _
    %v38 = vld [vmem:[#allocation2] sm:$0xff]
    %v39 = vld [vmem:[#allocation5] sm:$0xff]
    %v40 = vld [vmem:[#allocation5 + $0x8] sm:$0xff]
    %v41 = vld [vmem:[#allocation5 + $0x10] sm:$0xff]
    %v42 = vld [vmem:[#allocation5 + $0x18] sm:$0xff]
    %v43 = vld [vmem:[#allocation5 + $0x20] sm:$0xff]
    %v44 = vld [vmem:[#allocation5 + $0x28] sm:$0xff]
    %v45 = vld [vmem:[#allocation5 + $0x30] sm:$0xff]
    %v46 = vld [vmem:[#allocation5 + $0x38] sm:$0xff]
    %v47 = vld [vmem:[#allocation5 + $0x40] sm:$0xff]
    %v48 = vld [vmem:[#allocation5 + $0x48] sm:$0xff]
    %v49 = vld [vmem:[#allocation5 + $0x50] sm:$0xff]
    %v50 = vld [vmem:[#allocation5 + $0x58] sm:$0xff]
    %v51 = vld [vmem:[#allocation5 + $0x60] sm:$0xff]
    %v52 = vld [vmem:[#allocation5 + $0x68] sm:$0xff]
    %v53 = vld [vmem:[#allocation5 + $0x70] sm:$0xff]
    %v54 = vld [vmem:[#allocation5 + $0x78] sm:$0xff]
    %v55 = vld [vmem:[#allocation5 + $0x80] sm:$0xff]
    %v56 = vld [vmem:[#allocation5 + $0x88] sm:$0xff]
    %v57 = vld [vmem:[#allocation5 + $0x90] sm:$0xff]
    %v58 = vld [vmem:[#allocation5 + $0x98] sm:$0xff]
    %v59 = vld [vmem:[#allocation5 + $0xa0] sm:$0xff]
    %v60 = vld [vmem:[#allocation5 + $0xa8] sm:$0xff]
    %v61 = vld [vmem:[#allocation5 + $0xb0] sm:$0xff]
    %v62 = vld [vmem:[#allocation5 + $0xb8] sm:$0xff]
    %v63 = vld [vmem:[#allocation5 + $0xc0] sm:$0xff]
    %v64 = vld [vmem:[#allocation5 + $0xc8] sm:$0xff]
    %v65 = vld [vmem:[#allocation5 + $0xd0] sm:$0xff]
    %v66 = vld [vmem:[#allocation5 + $0xd8] sm:$0xff]
    %v67 = vld [vmem:[#allocation5 + $0xe0] sm:$0xff]
    %v68 = vld [vmem:[#allocation5 + $0xe8] sm:$0xff]
    %v69 = vld [vmem:[#allocation5 + $0xf0] sm:$0xff]
    %v70 = vld [vmem:[#allocation5 + $0xf8] sm:$0xff]
    %v72 = vunpack.c.l.b16 %v38
    %v73 = vunpack.c.h.b16 %v38
    %v74 = vpack.c.b16 %v72, %v72
    %v75 = vpack.c.b16 %v73, %v73
    %v110 = vunpack.c.l.b16 %v39
    %v111 = vunpack.c.h.b16 %v39
    %v112 = vunpack.c.l.b16 %v40
    %v113 = vunpack.c.h.b16 %v40
    %v114 = vunpack.c.l.b16 %v41
    %v115 = vunpack.c.h.b16 %v41
    %v116 = vunpack.c.l.b16 %v42
    %v117 = vunpack.c.h.b16 %v42
    %v118 = vunpack.c.l.b16 %v43
    %v119 = vunpack.c.h.b16 %v43
    %v120 = vunpack.c.l.b16 %v44
    %v121 = vunpack.c.h.b16 %v44
    %v122 = vunpack.c.l.b16 %v45
    %v123 = vunpack.c.h.b16 %v45
    %v124 = vunpack.c.l.b16 %v46
    %v125 = vunpack.c.h.b16 %v46
    %v126 = vunpack.c.l.b16 %v47
    %v127 = vunpack.c.h.b16 %v47
    %v128 = vunpack.c.l.b16 %v48
    %v129 = vunpack.c.h.b16 %v48
    %v130 = vunpack.c.l.b16 %v49
    %v131 = vunpack.c.h.b16 %v49
    %v132 = vunpack.c.l.b16 %v50
    %v133 = vunpack.c.h.b16 %v50
    %v134 = vunpack.c.l.b16 %v51
    %v135 = vunpack.c.h.b16 %v51
    %v136 = vunpack.c.l.b16 %v52
    %v137 = vunpack.c.h.b16 %v52
    %v138 = vunpack.c.l.b16 %v53
    %v139 = vunpack.c.h.b16 %v53
    %v140 = vunpack.c.l.b16 %v54
    %v141 = vunpack.c.h.b16 %v54
    %v142 = vunpack.c.l.b16 %v55
    %v143 = vunpack.c.h.b16 %v55
    %v144 = vunpack.c.l.b16 %v56
    %v145 = vunpack.c.h.b16 %v56
    %v146 = vunpack.c.l.b16 %v57
    %v147 = vunpack.c.h.b16 %v57
    %v148 = vunpack.c.l.b16 %v58
    %v149 = vunpack.c.h.b16 %v58
    %v150 = vunpack.c.l.b16 %v59
    %v151 = vunpack.c.h.b16 %v59
    %v152 = vunpack.c.l.b16 %v60
    %v153 = vunpack.c.h.b16 %v60
    %v154 = vunpack.c.l.b16 %v61
    %v155 = vunpack.c.h.b16 %v61
    %v156 = vunpack.c.l.b16 %v62
    %v157 = vunpack.c.h.b16 %v62
    %v158 = vunpack.c.l.b16 %v63
    %v159 = vunpack.c.h.b16 %v63
    %v160 = vunpack.c.l.b16 %v64
    %v161 = vunpack.c.h.b16 %v64
    %v162 = vunpack.c.l.b16 %v65
    %v163 = vunpack.c.h.b16 %v65
    %v164 = vunpack.c.l.b16 %v66
    %v165 = vunpack.c.h.b16 %v66
    %v166 = vunpack.c.l.b16 %v67
    %v167 = vunpack.c.h.b16 %v67
    %v168 = vunpack.c.l.b16 %v68
    %v169 = vunpack.c.h.b16 %v68
    %v170 = vunpack.c.l.b16 %v69
    %v171 = vunpack.c.h.b16 %v69
    %v172 = vunpack.c.l.b16 %v70
    %v173 = vunpack.c.h.b16 %v70
    %v174 = vpack.c.b16 %v112, %v110
    %v175 = vpack.c.b16 %v113, %v111
    %v176 = vpack.c.b16 %v116, %v114
    %v177 = vpack.c.b16 %v117, %v115
    %v178 = vpack.c.b16 %v120, %v118
    %v179 = vpack.c.b16 %v121, %v119
    %v180 = vpack.c.b16 %v124, %v122
    %v181 = vpack.c.b16 %v125, %v123
    %v182 = vpack.c.b16 %v128, %v126
    %v183 = vpack.c.b16 %v129, %v127
    %v184 = vpack.c.b16 %v132, %v130
    %v185 = vpack.c.b16 %v133, %v131
    %v186 = vpack.c.b16 %v136, %v134
    %v187 = vpack.c.b16 %v137, %v135
    %v188 = vpack.c.b16 %v140, %v138
    %v189 = vpack.c.b16 %v141, %v139
    %v190 = vpack.c.b16 %v144, %v142
    %v191 = vpack.c.b16 %v145, %v143
    %v192 = vpack.c.b16 %v148, %v146
    %v193 = vpack.c.b16 %v149, %v147
    %v194 = vpack.c.b16 %v152, %v150
    %v195 = vpack.c.b16 %v153, %v151
    %v196 = vpack.c.b16 %v156, %v154
    %v197 = vpack.c.b16 %v157, %v155
    %v198 = vpack.c.b16 %v160, %v158
    %v199 = vpack.c.b16 %v161, %v159
    %v200 = vpack.c.b16 %v164, %v162
    %v201 = vpack.c.b16 %v165, %v163
    %v202 = vpack.c.b16 %v168, %v166
    %v203 = vpack.c.b16 %v169, %v167
    %v204 = vpack.c.b16 %v172, %v170
    %v205 = vpack.c.b16 %v173, %v171
    %238 = vmatprep.subr.bf16.mxu0 %v175
    %239 = vmatpush1.bf16.msra.mxu0 %v174
    %240 = vmatprep.subr.bf16.mxu0 %v177
    %241 = vmatpush1.bf16.msra.mxu0 %v176
    %242 = vmatprep.subr.bf16.mxu0 %v179
    %243 = vmatpush1.bf16.msra.mxu0 %v178
    %244 = vmatprep.subr.bf16.mxu0 %v181
    %245 = vmatpush1.bf16.msra.mxu0 %v180
    %246 = vmatprep.subr.bf16.mxu0 %v183
    %247 = vmatpush1.bf16.msra.mxu0 %v182
    %248 = vmatprep.subr.bf16.mxu0 %v185
    %249 = vmatpush1.bf16.msra.mxu0 %v184
    %250 = vmatprep.subr.bf16.mxu0 %v187
    %251 = vmatpush1.bf16.msra.mxu0 %v186
    %252 = vmatprep.subr.bf16.mxu0 %v189
    %253 = vmatpush1.bf16.msra.mxu0 %v188
    %254 = vmatprep.subr.bf16.mxu0 %v191
    %255 = vmatpush1.bf16.msra.mxu0 %v190
    %256 = vmatprep.subr.bf16.mxu0 %v193
    %257 = vmatpush1.bf16.msra.mxu0 %v192
    %258 = vmatprep.subr.bf16.mxu0 %v195
    %259 = vmatpush1.bf16.msra.mxu0 %v194
    %260 = vmatprep.subr.bf16.mxu0 %v197
    %261 = vmatpush1.bf16.msra.mxu0 %v196
    %262 = vmatprep.subr.bf16.mxu0 %v199
    %263 = vmatpush1.bf16.msra.mxu0 %v198
    %264 = vmatprep.subr.bf16.mxu0 %v201
    %265 = vmatpush1.bf16.msra.mxu0 %v200
    %266 = vmatprep.subr.bf16.mxu0 %v203
    %267 = vmatpush1.bf16.msra.mxu0 %v202
    %268 = vmatprep.subr.bf16.mxu0 %v205
    %269 = vmatpush1.bf16.msra.mxu0 %v204
    %270 = vmatprep.mubr.bf16.mxu0 %v75
    %271 = vmatmul.mubr.bf16.gmra.mrb[0].mxu0 %v74
    %v272 = vpop.f32.mrb[0].mxu0
    %v273 = vadd.f32 0.0, %v272
    %v274 = vpop.f32.mrb[0].mxu0
    %v275 = vadd.f32 0.0, %v274
    %v276 = vpop.f32.mrb[0].mxu0
    %v277 = vpop.f32.mrb[0].mxu0
    %278 = vdwg.mxu0
    %279 = vst [vmem:[#allocation7] sm:$0xff] %v273
    %280 = vst [vmem:[#allocation7 + $0x8] sm:$0xff] %v275
    // Predicated region
    $region18: #{tpu_custom_call.1} parent=1 // pred_check
      _
    $region19: #{tpu_custom_call.1} parent=1 // pred_check_branch
      %282 = sbr.rel (0) target = $region21
    $region20: #{tpu_custom_call.1} parent=1 // pred_region
      %s284 = ssub.s32 256, 256
      %285 = vsyncadd [#allocation4], %s284
      %s287 = sshll.u32 [#allocation7], 4
      %s288 = int_to_ptr.vmem [resolvable:$true] %s287
      %290 = dma.vmem_to_hbm [thread:$0]  %s288, 256, %s2, [#allocation4]
    $region21: #{tpu_custom_call.1} parent=1 // pred_fallthru
      _
    // Predicated region
    $region22: #{tpu_custom_call.1} parent=1 // pred_check
      _
    $region23: #{tpu_custom_call.1} parent=1 // pred_check_branch
      %292 = sbr.rel (0) target = $region25
    $region24: #{tpu_custom_call.1} parent=1 // pred_region
      %293 = dma.done [#allocation4], 256
    $region25: #{tpu_custom_call.1} parent=1 // pred_fallthru
      _
    %294 = vsyncpa [#allocation3], 1
    %295 = vsyncpa [#allocation6], 1
    %296 = vsyncpa [#allocation4], 1

</llo_original>
